<compile_context>
chip_gen: v7x
topology: tpu7x:2x2x1
jax: 0.10.0
libtpu: 0.0.40
codegen_flags: <defaults>
</compile_context>

<pallas_src>
import re
import numpy as np
import jax
import jax.numpy as jnp
from jax.experimental import pallas as pl
from jax.experimental.pallas import tpu as pltpu

L = 128            # sequence length (lane axis)
PROFILE_LEN = 31   # LongPatchBer profile width (nn.Parameter of size 31)
HALF = PROFILE_LEN // 2


# ---------------------------------------------------------------------------
# Kernel body (pure jnp on VMEM tiles).  mmmr is None when ung_prob == 1.0,
# which statically removes the whole MisMatchRepair branch.
# ---------------------------------------------------------------------------
def _two_phase_body(rp, ung, spb, T, TT, aid, mlp, mmmr):
    one = jnp.float32(1.0)

    # --- Scalar-coefficient folding (sreg work, free) ---
    ep = one - rp                                     # error-prone coefficient
    if isinstance(ung, float) and ung == 1.0:
        c_direct = rp + ep * spb                      # replication + SP-BER
        c_lp = ep * (one - spb)                       # LP-BER centers
        c_mmr = None
    else:
        c_direct = rp + ep * ung * spb
        c_lp = ep * ung * (one - spb)
        c_mmr = ep * (one - ung)

    # --- Phase1: targeting_probs_phase1 = normalize(aid motif probs) ---
    aid_sum = jnp.sum(aid, axis=-1, keepdims=True)                     # (TB, 1)
    inv_aid = pl.reciprocal(jnp.where(aid_sum == 0.0, one, aid_sum), approx=True)
    tp1 = aid * inv_aid                                                # (TB, L)

    # --- LongPatchBer.forward_vectorized ---
    # row_sums[b, p] = sum_j T[p, j] * mlp[b, j]  ->  mlp @ T^T   (NN dot)
    row_sums = jnp.dot(mlp, TT, preferred_element_type=jnp.float32)    # (TB, L)
    inv_rows = pl.reciprocal(jnp.where(row_sums == 0.0, one, row_sums), approx=True)
    lp_centers = tp1 * c_lp
    w = jnp.where(lp_centers > 0.0, lp_centers * inv_rows, 0.0)        # (TB, L)
    # conv_out[b, j] = sum_p w[b, p] * T[p, j]  ->  w @ T   (NN dot)
    conv_out = jnp.dot(w, T, preferred_element_type=jnp.float32)       # (TB, L)
    lp_targets = mlp * conv_out

    targ = tp1 * c_direct + lp_targets

    # --- MisMatchRepair.forward (only when ung_prob != 1.0) ---
    if mmmr is not None:
        # sum(mmr_centers) = c_mmr * sum(tp1) = c_mmr * aid_sum * inv_aid
        mmr_scale = c_mmr * (aid_sum * inv_aid)                        # (TB, 1)
        mm_sum = jnp.sum(mmmr, axis=-1, keepdims=True)
        inv_mm = pl.reciprocal(jnp.where(mm_sum == 0.0, one, mm_sum), approx=True)
        targ = targ + (mmmr * inv_mm) * mmr_scale

    # repl only depends on the sign of the raw AID probs (inv_aid > 0 always),
    # so compute it from the input and let its store overlap the matmul path.
    repl = jnp.where(aid > 0.0, rp, jnp.float32(0.0))
    return targ, repl


def _kernel_full(scal_ref, T_ref, TT_ref, aid_ref, mlp_ref, mmmr_ref,
                 targ_ref, repl_ref):
    # Read SMEM scalars first, before any vector work.
    rp = scal_ref[0]
    ung = scal_ref[1]
    spb = scal_ref[2]
    targ, repl = _two_phase_body(rp, ung, spb, T_ref[...], TT_ref[...],
                                 aid_ref[...], mlp_ref[...], mmmr_ref[...])
    targ_ref[...] = targ
    repl_ref[...] = repl


def _kernel_ung1(scal_ref, T_ref, TT_ref, aid_ref, mlp_ref, targ_ref, repl_ref):
    # ung_prob == 1.0: MMR branch contributes exactly zero -> statically removed.
    rp = scal_ref[0]
    spb = scal_ref[2]
    targ, repl = _two_phase_body(rp, 1.0, spb, T_ref[...], TT_ref[...],
                                 aid_ref[...], mlp_ref[...], None)
    targ_ref[...] = targ
    repl_ref[...] = repl


# ---------------------------------------------------------------------------
# Wrapper: batched pallas_call with a parallel grid over batch blocks.
# ---------------------------------------------------------------------------
def _pick_tb(B, tb):
    if tb is not None:
        assert B % tb == 0 and tb % 8 == 0, \
            "batch block must divide B and be a multiple of 8"
        return tb
    cap = min(B, 2048)
    cands = [t for t in range(8, cap + 1, 8) if B % t == 0]
    assert cands, "B must be divisible by some multiple of 8 (pad the batch on host)"
    # Prefer >= 2 grid steps so the parallel axis actually shards across both
    # TensorCores on v7x; harmless on v5e/v6e.
    pref = [t for t in cands if B // t >= 2]
    return max(pref) if pref else max(cands)


def two_phase_forward(replication_prob, ung_prob, short_patch_ber_prob,
                      T, TT, aid_probs, lp_probs, mmr_probs, *, tb=None):
    B, Lseq = aid_probs.shape
    assert Lseq == L, f"sequence length must be {L}"
    tb = _pick_tb(B, tb)
    nb = B // tb

    include_mmr = float(ung_prob) != 1.0
    scalars = jnp.asarray([replication_prob, ung_prob, short_patch_ber_prob],
                          dtype=jnp.float32)

    vec_spec = pl.BlockSpec((tb, L), lambda b: (b, 0))          # batched (TB, L) tiles
    mat_spec = pl.BlockSpec((L, L), lambda b: (0, 0))           # VMEM-resident across grid
    smem_spec = pl.BlockSpec(memory_space=pltpu.MemorySpace.SMEM)

    in_specs = [smem_spec, mat_spec, mat_spec, vec_spec, vec_spec]
    inputs = [scalars, T, TT, aid_probs, lp_probs]
    if include_mmr:
        in_specs.append(vec_spec)
        inputs.append(mmr_probs)
        kernel = _kernel_full
    else:
        kernel = _kernel_ung1

    # Explicit VMEM limit with headroom (v5e's default scoped VMEM is 16 MiB);
    # capped below v7x's 64 MiB physical VMEM.
    n_streams = (3 if include_mmr else 2) + 2                    # inputs + outputs
    vmem_bytes = n_streams * 2 * tb * L * 4 + 2 * 2 * L * L * 4  # double-buffered
    vmem_limit = min(max(32 << 20, int(1.5 * vmem_bytes)), 60 << 20)

    out_shape = (jax.ShapeDtypeStruct((B, L), jnp.float32),
                 jax.ShapeDtypeStruct((B, L), jnp.float32))
    fn = pl.pallas_call(
        kernel,
        grid=(nb,),
        in_specs=in_specs,
        out_specs=(vec_spec, vec_spec),
        out_shape=out_shape,
        compiler_params=pltpu.CompilerParams(
            dimension_semantics=("parallel",),                   # 2x on v7x's two TCs
            vmem_limit_bytes=vmem_limit),
    )
    targeting, replication = fn(*inputs)
    return targeting, replication


# ---------------------------------------------------------------------------
# Host-side glue: regex motif assignment + Toeplitz construction.
# ---------------------------------------------------------------------------
AMBIG = {"W": "[AT]", "R": "[AG]", "Y": "[CT]", "S": "[GC]",
         "K": "[GT]", "M": "[AC]", "N": "[ACGT]"}


def motif_ambiguity_to_regex(motif):
    return "".join(AMBIG.get(ch, ch) for ch in motif)


# TODO(synk): exact assign_motif_probs semantics are external to the snippet;
# regex/string matching has no Pallas equivalent, so it is done on host.  A
# small `baseline` floor is used for the repair-pathway motifs so that no
# 31-wide window has zero total motif mass.
def assign_motif_probs(seq, motifs_anchor, motifs_prob, baseline):
    n = len(seq)
    probs = np.full(n, baseline, dtype=np.float64)
    for i, (motif, anchor) in enumerate(motifs_anchor.items()):
        pat = re.compile("(?=(" + motif_ambiguity_to_regex(motif) + "))")
        for mt in pat.finditer(seq):
            pos = mt.start() + anchor
            if pos < n:
                probs[pos] = float(motifs_prob[i])
    return probs


def build_toeplitz(profile_f32):
    """T[p, j] = profile[p - j + HALF]  ('same'-padded conv1d of one-hot centers)."""
    p = np.arange(L)[:, None]
    j = np.arange(L)[None, :]
    k = p - j + HALF
    valid = (k >= 0) & (k < PROFILE_LEN)
    return np.where(valid, profile_f32[np.clip(k, 0, PROFILE_LEN - 1)], 0.0).astype(np.float32)


def reference_two_phase(aid_raw, mlp, mmmr, profile, rp, ung, spb):
    """Float64 NumPy port of TwoPhaseModel.forward for one sequence."""
    tp1 = aid_raw / aid_raw.sum()
    replication = tp1 * rp
    error_prone = tp1 * (1.0 - rp)
    ung_probs = error_prone * ung
    spb_probs = ung_probs * spb
    lp_c = ung_probs * (1.0 - spb)

    mask = lp_c > 0
    centers = np.where(mask)[0]
    cp = np.zeros((len(centers), L), dtype=np.float64)
    for r, p in enumerate(centers):
        for j in range(max(0, p - HALF), min(L, p + HALF + 1)):
            cp[r, j] = profile[p - j + HALF]
    acc = cp * mlp[None, :]
    acc = acc / acc.sum(axis=1, keepdims=True)
    lp_targets = lp_c[mask] @ acc

    mmr_probs = (mmmr / mmmr.sum()) * (error_prone * (1.0 - ung)).sum()
    targeting = replication + mmr_probs + spb_probs + lp_targets
    repl = np.where(tp1 > 0, rp, 0.0)
    return targeting, repl


if __name__ == "__main__":
    B = 16
    key = jax.random.PRNGKey(0)
    base_idx = np.array(jax.random.randint(key, (B, L), 0, 4))
    sequences = ["".join("ACGT"[i] for i in row) for row in base_idx]

    # Deterministic module parameters (as in the torch __init__).
    profile = np.ones(PROFILE_LEN, dtype=np.float64) / PROFILE_LEN   # normalize(ones(31))
    # TODO(synk): motifs_and_anchors_* tables are external to the snippet; small
    # representative tables are used here.  MODEL_VERSION=='v3' only changes
    # parameter-vector sizes and is not modeled.
    motifs_and_anchors_aid = {"WRC": 2, "WA": 1}
    motifs_and_anchors_lp_ber = {"WRC": 2, "WA": 1}
    motifs_and_anchors_mmr = {"RGYW": 2}
    aid_motifs_prob = np.ones(len(motifs_and_anchors_aid)) / len(motifs_and_anchors_aid)
    lp_motifs_prob = np.ones(len(motifs_and_anchors_lp_ber)) / len(motifs_and_anchors_lp_ber)
    mmr_motifs_prob = np.ones(len(motifs_and_anchors_mmr)) / len(motifs_and_anchors_mmr)
    replication_prob, ung_prob, short_patch_ber_prob = 0.5, 1.0, 0.5

    # Host-side regex motif assignment.  AID motifs use a 0 baseline so
    # targeting_probs_phase1 has exact zeros (exercises the >0 masks).
    aid_raw = np.stack([assign_motif_probs(s, motifs_and_anchors_aid, aid_motifs_prob, 0.0)
                        for s in sequences])
    mlp = np.stack([assign_motif_probs(s, motifs_and_anchors_lp_ber, lp_motifs_prob, 1e-3)
                    for s in sequences])
    mmmr = np.stack([assign_motif_probs(s, motifs_and_anchors_mmr, mmr_motifs_prob, 1e-3)
                     for s in sequences])

    T = build_toeplitz(profile.astype(np.float32))
    TT = np.ascontiguousarray(T.T)

    aid_j = jnp.asarray(aid_raw, dtype=jnp.float32)
    mlp_j = jnp.asarray(mlp, dtype=jnp.float32)
    mmmr_j = jnp.asarray(mmmr, dtype=jnp.float32)
    T_j = jnp.asarray(T)
    TT_j = jnp.asarray(TT)

    # Run 1: module defaults (ung_prob = 1.0 -> MMR branch statically removed).
    targ, repl = two_phase_forward(replication_prob, ung_prob, short_patch_ber_prob,
                                   T_j, TT_j, aid_j, mlp_j, mmmr_j)
    targ = jax.block_until_ready(targ)
    repl = jax.block_until_ready(repl)

    # Run 2: general path (ung_prob != 1.0 -> MMR branch active in-kernel).
    ung_alt = 0.7
    targ2, repl2 = two_phase_forward(replication_prob, ung_alt, short_patch_ber_prob,
                                     T_j, TT_j, aid_j, mlp_j, mmmr_j)
    targ2 = jax.block_until_ready(targ2)
    repl2 = jax.block_until_ready(repl2)

    targ, repl, targ2, repl2 = (np.asarray(x) for x in (targ, repl, targ2, repl2))

    for b in range(B):
        rt, rr = reference_two_phase(aid_raw[b], mlp[b], mmmr[b], profile,
                                     replication_prob, ung_prob, short_patch_ber_prob)
        assert np.allclose(targ[b], rt, rtol=1e-3, atol=1e-6), f"targeting mismatch (ung=1), seq {b}"
        assert np.allclose(repl[b], rr, rtol=1e-6, atol=1e-7), f"replication mismatch (ung=1), seq {b}"

        rt2, rr2 = reference_two_phase(aid_raw[b], mlp[b], mmmr[b], profile,
                                       replication_prob, ung_alt, short_patch_ber_prob)
        assert np.allclose(targ2[b], rt2, rtol=1e-3, atol=1e-6), f"targeting mismatch (ung!=1), seq {b}"
        assert np.allclose(repl2[b], rr2, rtol=1e-6, atol=1e-7), f"replication mismatch (ung!=1), seq {b}"

    print("KERNEL_OK")
</pallas_src>

<mosaic_0001>
module attributes {stable_mosaic.version = 11 : i64} {
  func.func @_kernel_ung1(%arg0: i32, %arg1: memref<3xf32, #tpu.memory_space<smem>>, %arg2: memref<128x128xf32, #tpu.memory_space<vmem>>, %arg3: memref<128x128xf32, #tpu.memory_space<vmem>>, %arg4: memref<8x128xf32, #tpu.memory_space<vmem>>, %arg5: memref<8x128xf32, #tpu.memory_space<vmem>>, %arg6: memref<8x128xf32, #tpu.memory_space<vmem>>, %arg7: memref<8x128xf32, #tpu.memory_space<vmem>>) attributes {dimension_semantics = [#tpu.dimension_semantics<parallel>], iteration_bounds = array<i64: 2>, scalar_prefetch = 0 : i64, scratch_operands = 0 : i64, tpu.core_type = #tpu.core_type<tc>, window_params = [{transform_indices = @transform_0, window_bounds = array<i64: 3>}, {pipeline_mode = #tpu.pipeline_mode<synchronous>, transform_indices = @transform_1, window_bounds = array<i64: 128, 128>}, {pipeline_mode = #tpu.pipeline_mode<synchronous>, transform_indices = @transform_2, window_bounds = array<i64: 128, 128>}, {transform_indices = @transform_3, window_bounds = array<i64: 8, 128>}, {transform_indices = @transform_4, window_bounds = array<i64: 8, 128>}, {transform_indices = @transform_5, window_bounds = array<i64: 8, 128>}, {transform_indices = @transform_6, window_bounds = array<i64: 8, 128>}]} {
    %c0 = arith.constant 0 : index
    %0 = memref.load %arg1[%c0] : memref<3xf32, #tpu.memory_space<smem>>
    %c2 = arith.constant 2 : index
    %1 = memref.load %arg1[%c2] : memref<3xf32, #tpu.memory_space<smem>>
    %c0_0 = arith.constant 0 : index
    %c0_1 = arith.constant 0 : index
    %2 = vector.load %arg2[%c0_0, %c0_1] : memref<128x128xf32, #tpu.memory_space<vmem>>, vector<128x128xf32>
    %c0_2 = arith.constant 0 : index
    %c0_3 = arith.constant 0 : index
    %3 = vector.load %arg3[%c0_2, %c0_3] : memref<128x128xf32, #tpu.memory_space<vmem>>, vector<128x128xf32>
    %c0_4 = arith.constant 0 : index
    %c0_5 = arith.constant 0 : index
    %4 = vector.load %arg4[%c0_4, %c0_5] : memref<8x128xf32, #tpu.memory_space<vmem>>, vector<8x128xf32>
    %c0_6 = arith.constant 0 : index
    %c0_7 = arith.constant 0 : index
    %5 = vector.load %arg5[%c0_6, %c0_7] : memref<8x128xf32, #tpu.memory_space<vmem>>, vector<8x128xf32>
    %cst = arith.constant 1.000000e+00 : f32
    %6 = arith.subf %cst, %0 : f32
    %7 = arith.mulf %6, %1 : f32
    %8 = arith.addf %0, %7 : f32
    %cst_8 = arith.constant 1.000000e+00 : f32
    %9 = arith.subf %cst_8, %1 : f32
    %10 = arith.mulf %6, %9 : f32
    %cst_9 = arith.constant dense<0.000000e+00> : vector<8xf32>
    %11 = vector.multi_reduction <add>, %4, %cst_9 [1] : vector<8x128xf32> to vector<8xf32>
    %12 = vector.shape_cast %11 : vector<8xf32> to vector<8x1xf32>
    %cst_10 = arith.constant 0.000000e+00 : f32
    %13 = vector.broadcast %cst_10 : f32 to vector<8x1xf32>
    %14 = arith.cmpf oeq, %12, %13 : vector<8x1xf32>
    %cst_11 = arith.constant 1.000000e+00 : f32
    %15 = vector.broadcast %cst_11 : f32 to vector<8x1xf32>
    %16 = arith.select %14, %15, %12 : vector<8x1xi1>, vector<8x1xf32>
    %17 = tpu.reciprocal %16 {approx = true} : vector<8x1xf32> -> vector<8x1xf32>
    %18 = vector.broadcast %17 : vector<8x1xf32> to vector<8x128xf32>
    %19 = arith.mulf %4, %18 : vector<8x128xf32>
    %cst_12 = arith.constant dense<0.000000e+00> : vector<8x128xf32>
    %20 = tpu.matmul %5, %3, %cst_12 {dimension_numbers = #tpu.dot_dimension_numbers<[1], [0], [0], [1], [0, 0, 1, 1], [], []>} : vector<8x128xf32>, vector<128x128xf32>, vector<8x128xf32> -> vector<8x128xf32>
    %cst_13 = arith.constant 0.000000e+00 : f32
    %21 = vector.broadcast %cst_13 : f32 to vector<8x128xf32>
    %22 = arith.cmpf oeq, %20, %21 : vector<8x128xf32>
    %cst_14 = arith.constant 1.000000e+00 : f32
    %23 = vector.broadcast %cst_14 : f32 to vector<8x128xf32>
    %24 = arith.select %22, %23, %20 : vector<8x128xi1>, vector<8x128xf32>
    %25 = tpu.reciprocal %24 {approx = true} : vector<8x128xf32> -> vector<8x128xf32>
    %26 = vector.broadcast %10 : f32 to vector<8x128xf32>
    %27 = arith.mulf %19, %26 : vector<8x128xf32>
    %cst_15 = arith.constant 0.000000e+00 : f32
    %28 = vector.broadcast %cst_15 : f32 to vector<8x128xf32>
    %29 = arith.cmpf ogt, %27, %28 : vector<8x128xf32>
    %30 = arith.mulf %27, %25 : vector<8x128xf32>
    %cst_16 = arith.constant 0.000000e+00 : f32
    %31 = vector.broadcast %cst_16 : f32 to vector<8x128xf32>
    %32 = arith.select %29, %30, %31 : vector<8x128xi1>, vector<8x128xf32>
    %cst_17 = arith.constant dense<0.000000e+00> : vector<8x128xf32>
    %33 = tpu.matmul %32, %2, %cst_17 {dimension_numbers = #tpu.dot_dimension_numbers<[1], [0], [0], [1], [0, 0, 1, 1], [], []>} : vector<8x128xf32>, vector<128x128xf32>, vector<8x128xf32> -> vector<8x128xf32>
    %34 = arith.mulf %5, %33 : vector<8x128xf32>
    %35 = vector.broadcast %8 : f32 to vector<8x128xf32>
    %36 = arith.mulf %19, %35 : vector<8x128xf32>
    %37 = arith.addf %36, %34 : vector<8x128xf32>
    %cst_18 = arith.constant 0.000000e+00 : f32
    %38 = vector.broadcast %cst_18 : f32 to vector<8x128xf32>
    %39 = arith.cmpf ogt, %4, %38 : vector<8x128xf32>
    %cst_19 = arith.constant 0.000000e+00 : f32
    %40 = vector.broadcast %0 : f32 to vector<8x128xf32>
    %41 = vector.broadcast %cst_19 : f32 to vector<8x128xf32>
    %42 = arith.select %39, %40, %41 : vector<8x128xi1>, vector<8x128xf32>
    %c0_20 = arith.constant 0 : index
    %c0_21 = arith.constant 0 : index
    %43 = vector.load %arg6[%c0_20, %c0_21] : memref<8x128xf32, #tpu.memory_space<vmem>>, vector<8x128xf32>
    tpu.vector_store %arg6[%c0_20, %c0_21], %37 {strides = array<i32>} : memref<8x128xf32, #tpu.memory_space<vmem>>, vector<8x128xf32>,
    %c0_22 = arith.constant 0 : index
    %c0_23 = arith.constant 0 : index
    %44 = vector.load %arg7[%c0_22, %c0_23] : memref<8x128xf32, #tpu.memory_space<vmem>>, vector<8x128xf32>
    tpu.vector_store %arg7[%c0_22, %c0_23], %42 {strides = array<i32>} : memref<8x128xf32, #tpu.memory_space<vmem>>, vector<8x128xf32>,
    return
  }
  func.func @transform_0(%arg0: i32) -> i32 {
    %c0_i32 = arith.constant 0 : i32
    %c0_i32_0 = arith.constant 0 : i32
    return %c0_i32 : i32
  }
  func.func @transform_1(%arg0: i32) -> (i32, i32) {
    %c0_i32 = arith.constant 0 : i32
    %c0_i32_0 = arith.constant 0 : i32
    %c0_i32_1 = arith.constant 0 : i32
    return %c0_i32, %c0_i32_0 : i32, i32
  }
  func.func @transform_2(%arg0: i32) -> (i32, i32) {
    %c0_i32 = arith.constant 0 : i32
    %c0_i32_0 = arith.constant 0 : i32
    %c0_i32_1 = arith.constant 0 : i32
    return %c0_i32, %c0_i32_0 : i32, i32
  }
  func.func @transform_3(%arg0: i32) -> (i32, i32) {
    %c0_i32 = arith.constant 0 : i32
    %c0_i32_0 = arith.constant 0 : i32
    return %arg0, %c0_i32 : i32, i32
  }
  func.func @transform_4(%arg0: i32) -> (i32, i32) {
    %c0_i32 = arith.constant 0 : i32
    %c0_i32_0 = arith.constant 0 : i32
    return %arg0, %c0_i32 : i32, i32
  }
  func.func @transform_5(%arg0: i32) -> (i32, i32) {
    %c0_i32 = arith.constant 0 : i32
    %c0_i32_0 = arith.constant 0 : i32
    return %arg0, %c0_i32 : i32, i32
  }
  func.func @transform_6(%arg0: i32) -> (i32, i32) {
    %c0_i32 = arith.constant 0 : i32
    %c0_i32_0 = arith.constant 0 : i32
    return %arg0, %c0_i32 : i32, i32
  }
}

</mosaic_0001>

<llo_original>
// kernel: tpu_custom_call.1
$region0: #{tpu_custom_call.1}
  #allocation0 [shape = 'u32[]', space=smem, size = 0x4, offset = 0x4, fixed_abs, tag = 'smem constant byte address 0x4 - core index']
  #allocation1 [shape = 'u32[144,128]{1,0:T(1,128)}', space=vmem, size = 0x12000, scoped, tag = 'internal scratch']
  %s0 = inlined_call_operand.hbm [shape: f32[3], index: 0, kind: input, shape index: {}]
  %s1 = inlined_call_operand.hbm [shape: f32[128,128], index: 1, kind: input, shape index: {}]
  %s2 = inlined_call_operand.hbm [shape: f32[128,128], index: 2, kind: input, shape index: {}]
  %s3 = inlined_call_operand.hbm [shape: f32[16,128], index: 3, kind: input, shape index: {}]
  %s4 = inlined_call_operand.hbm [shape: f32[16,128], index: 4, kind: input, shape index: {}]
  %s5 = inlined_call_operand.hbm [shape: f32[16,128], index: 5, kind: output, shape index: {0}]
  %s6 = inlined_call_operand.hbm [shape: f32[16,128], index: 6, kind: output, shape index: {1}]
  %7 = xla_tuple %s5, %s6
  %s8 = sld [smem:[#allocation0]]
  $region81: #{tpu_custom_call.1} parent=0
    _
  %s10 = ssub.s32 1, %s8
  %s11 = scalar_select 0, %s10, %s8
  $region1: #{tpu_custom_call.1} parent=0
    #allocation2 [shape = 'u8[512]{0}', space=smem, size = 0x200, scoped, tag = 'input window, operand 0, single buffered']
    #allocation3 [shape = 's32[2]{0}', space=sflag, size = 0x8, scoped, tag = 'scoped memory for tpu_custom_call.1']
    #allocation4 [shape = 's32[2]{0}', space=sflag, size = 0x8, scoped, tag = 'scoped memory for tpu_custom_call.1']
    #allocation5 [shape = 's32[2]{0}', space=sflag, size = 0x8, scoped, tag = 'scoped memory for tpu_custom_call.1']
    #allocation6 [shape = 'u8[65536]{0}', space=vmem, size = 0x10000, scoped, tag = 'input window, operand 1, single buffered']
    #allocation7 [shape = 'u8[65536]{0}', space=vmem, size = 0x10000, scoped, tag = 'input window, operand 2, single buffered']
    #allocation8 [shape = 's32[1]{0}', space=sflag, size = 0x4, scoped, tag = 'scoped memory for tpu_custom_call.1']
    #allocation9 [shape = 'u8[8192]{0}', space=vmem, size = 0x2000, scoped, tag = 'input window, operand 3']
    #allocation10 [shape = 'u8[8192]{0}', space=vmem, size = 0x2000, scoped, tag = 'input window, operand 4']
    #allocation11 [shape = 'u8[8192]{0}', space=vmem, size = 0x2000, scoped, tag = 'output window, operand 0']
    #allocation12 [shape = 'u8[8192]{0}', space=vmem, size = 0x2000, scoped, tag = 'output window, operand 1']
    #allocation13 [shape = 's32[2]{0}', space=sflag, size = 0x8, scoped, tag = 'scoped memory for tpu_custom_call.1']
    %12 = vsyncpa [#allocation5], 0
    %13 = vsyncpa [#allocation3], 0
    %14 = vsyncpa [#allocation8], 0
    %15 = vsyncpa [#allocation4], 0
    %s16 = scalar_lea.sflag [#allocation4], 1
    %17 = vsyncpa %s16, 0
    %18 = vsyncpa [#allocation13], 0
    %s19 = scalar_lea.sflag [#allocation13], 1
    %20 = vsyncpa %s19, 0
    loop: start=0, step=1, limit=4
    $region2: #{tpu_custom_call.1} parent=1 // loop_pre_header
      _
    $region3: #{tpu_custom_call.1} parent=1 // loop_header
      %s22 = sphi 0, %s26
      %p23 = scmp.ge.s32.totalorder %s22, 4
      %s30 = sphi 0, %s30
      %s32 = sphi 0, %s30
      %s33 = sphi 0, %s32
      %s47 = sphi 0, %s33
      %s51 = sphi 0, %s51
      %s53 = sphi 0, %s51
      %s54 = sphi 0, %s53
      %s68 = sphi 0, %s54
      %s72 = sphi 0, %s72
      %s74 = sphi 0, %s72
      %s75 = sphi 0, %s74
      %s89 = sphi 0, %s75
      %s95 = sphi 0, %s97
      %s98 = sphi 0, %s95
      %s99 = sphi 0, %s98
      %s115 = sphi 0, %s99
      %s121 = sphi 0, %s123
      %s124 = sphi 0, %s121
      %s125 = sphi 0, %s124
      %s141 = sphi 0, %s125
      %s147 = sphi 0, %s149
      %s150 = sphi 0, %s147
      %s151 = sphi 0, %s150
      %s167 = sphi 0, %s151
      %s173 = sphi 0, %s175
      %s176 = sphi 0, %s173
      %s177 = sphi 0, %s176
      %s193 = sphi 0, %s177
    $region4: #{tpu_custom_call.1} parent=1 // loop_header_branch
      %25 = sbr.rel (%p23) target = $region8
    $region5: #{tpu_custom_call.1} parent=1 // loop_body
      %s27 = ssub.s32 %s22, 1
      %s28 = ssub.s32 %s22, 2
      %s29 = sadd.s32 %s22, 1
      %s31 = sadd.s32 %s30, 1
      %p34 = scmp.eq.s32.totalorder %s22, 1
      %p35 = scmp.ne.s32.totalorder %s30, %s32
      %p36 = scmp.eq.s32.totalorder %s22, 0
      %p37 = por %p35, %p36
      %p38 = scmp.ne.s32.totalorder %s30, %s32
      %p39 = scmp.eq.s32.totalorder %s27, 1
      %p40 = por %p38, %p39
      %p41 = scmp.ne.s32.totalorder %s32, %s33
      %p42 = scmp.eq.s32.totalorder %s27, 0
      %p43 = por %p41, %p42
      %p44 = scmp.ne.s32.totalorder %s32, %s33
      %p45 = scmp.eq.s32.totalorder %s28, 1
      %p46 = por %p44, %p45
      %p48 = scmp.ne.s32.totalorder %s33, %s47
      %p49 = scmp.eq.s32.totalorder %s28, 0
      %p50 = por %p48, %p49
      %s52 = sadd.s32 %s51, 1
      %p55 = scmp.eq.s32.totalorder %s22, 1
      %p56 = scmp.ne.s32.totalorder %s51, %s53
      %p57 = scmp.eq.s32.totalorder %s22, 0
      %p58 = por %p56, %p57
      %p59 = scmp.ne.s32.totalorder %s51, %s53
      %p60 = scmp.eq.s32.totalorder %s27, 1
      %p61 = por %p59, %p60
      %p62 = scmp.ne.s32.totalorder %s53, %s54
      %p63 = scmp.eq.s32.totalorder %s27, 0
      %p64 = por %p62, %p63
      %p65 = scmp.ne.s32.totalorder %s53, %s54
      %p66 = scmp.eq.s32.totalorder %s28, 1
      %p67 = por %p65, %p66
      %p69 = scmp.ne.s32.totalorder %s54, %s68
      %p70 = scmp.eq.s32.totalorder %s28, 0
      %p71 = por %p69, %p70
      %s73 = sadd.s32 %s72, 1
      %p76 = scmp.eq.s32.totalorder %s22, 1
      %p77 = scmp.ne.s32.totalorder %s72, %s74
      %p78 = scmp.eq.s32.totalorder %s22, 0
      %p79 = por %p77, %p78
      %p80 = scmp.ne.s32.totalorder %s72, %s74
      %p81 = scmp.eq.s32.totalorder %s27, 1
      %p82 = por %p80, %p81
      %p83 = scmp.ne.s32.totalorder %s74, %s75
      %p84 = scmp.eq.s32.totalorder %s27, 0
      %p85 = por %p83, %p84
      %p86 = scmp.ne.s32.totalorder %s74, %s75
      %p87 = scmp.eq.s32.totalorder %s28, 1
      %p88 = por %p86, %p87
      %p90 = scmp.ne.s32.totalorder %s75, %s89
      %p91 = scmp.eq.s32.totalorder %s28, 0
      %p92 = por %p90, %p91
      %s93 = ssub.s32 %s22, %s29
      %p94 = scmp.eq.s32.totalorder %s93, 0
      %s96 = sadd.s32 %s95, 1
      %s97 = scalar_select %p94, %s95, %s96
      %p100 = pneg %p94
      %p101 = scmp.eq.s32.totalorder %s22, 1
      %p102 = por %p100, %p101
      %p103 = scmp.ne.s32.totalorder %s95, %s98
      %p104 = scmp.eq.s32.totalorder %s22, 0
      %p105 = por %p103, %p104
      %p106 = scmp.ne.s32.totalorder %s95, %s98
      %p107 = scmp.eq.s32.totalorder %s27, 1
      %p108 = por %p106, %p107
      %p109 = scmp.ne.s32.totalorder %s98, %s99
      %p110 = scmp.eq.s32.totalorder %s27, 0
      %p111 = por %p109, %p110
      %p112 = scmp.ne.s32.totalorder %s98, %s99
      %p113 = scmp.eq.s32.totalorder %s28, 1
      %p114 = por %p112, %p113
      %p116 = scmp.ne.s32.totalorder %s99, %s115
      %p117 = scmp.eq.s32.totalorder %s28, 0
      %p118 = por %p116, %p117
      %s119 = ssub.s32 %s22, %s29
      %p120 = scmp.eq.s32.totalorder %s119, 0
      %s122 = sadd.s32 %s121, 1
      %s123 = scalar_select %p120, %s121, %s122
      %p126 = pneg %p120
      %p127 = scmp.eq.s32.totalorder %s22, 1
      %p128 = por %p126, %p127
      %p129 = scmp.ne.s32.totalorder %s121, %s124
      %p130 = scmp.eq.s32.totalorder %s22, 0
      %p131 = por %p129, %p130
      %p132 = scmp.ne.s32.totalorder %s121, %s124
      %p133 = scmp.eq.s32.totalorder %s27, 1
      %p134 = por %p132, %p133
      %p135 = scmp.ne.s32.totalorder %s124, %s125
      %p136 = scmp.eq.s32.totalorder %s27, 0
      %p137 = por %p135, %p136
      %p138 = scmp.ne.s32.totalorder %s124, %s125
      %p139 = scmp.eq.s32.totalorder %s28, 1
      %p140 = por %p138, %p139
      %p142 = scmp.ne.s32.totalorder %s125, %s141
      %p143 = scmp.eq.s32.totalorder %s28, 0
      %p144 = por %p142, %p143
      %s145 = ssub.s32 %s22, %s29
      %p146 = scmp.eq.s32.totalorder %s145, 0
      %s148 = sadd.s32 %s147, 1
      %s149 = scalar_select %p146, %s147, %s148
      %p152 = pneg %p146
      %p153 = scmp.eq.s32.totalorder %s22, 1
      %p154 = por %p152, %p153
      %p155 = scmp.ne.s32.totalorder %s147, %s150
      %p156 = scmp.eq.s32.totalorder %s22, 0
      %p157 = por %p155, %p156
      %p158 = scmp.ne.s32.totalorder %s147, %s150
      %p159 = scmp.eq.s32.totalorder %s27, 1
      %p160 = por %p158, %p159
      %p161 = scmp.ne.s32.totalorder %s150, %s151
      %p162 = scmp.eq.s32.totalorder %s27, 0
      %p163 = por %p161, %p162
      %p164 = scmp.ne.s32.totalorder %s150, %s151
      %p165 = scmp.eq.s32.totalorder %s28, 1
      %p166 = por %p164, %p165
      %p168 = scmp.ne.s32.totalorder %s151, %s167
      %p169 = scmp.eq.s32.totalorder %s28, 0
      %p170 = por %p168, %p169
      %s171 = ssub.s32 %s22, %s29
      %p172 = scmp.eq.s32.totalorder %s171, 0
      %s174 = sadd.s32 %s173, 1
      %s175 = scalar_select %p172, %s173, %s174
      %p178 = pneg %p172
      %p179 = scmp.eq.s32.totalorder %s22, 1
      %p180 = por %p178, %p179
      %p181 = scmp.ne.s32.totalorder %s173, %s176
      %p182 = scmp.eq.s32.totalorder %s22, 0
      %p183 = por %p181, %p182
      %p184 = scmp.ne.s32.totalorder %s173, %s176
      %p185 = scmp.eq.s32.totalorder %s27, 1
      %p186 = por %p184, %p185
      %p187 = scmp.ne.s32.totalorder %s176, %s177
      %p188 = scmp.eq.s32.totalorder %s27, 0
      %p189 = por %p187, %p188
      %p190 = scmp.ne.s32.totalorder %s176, %s177
      %p191 = scmp.eq.s32.totalorder %s28, 1
      %p192 = por %p190, %p191
      %p194 = scmp.ne.s32.totalorder %s177, %s193
      %p195 = scmp.eq.s32.totalorder %s28, 0
      %p196 = por %p194, %p195
      %p197 = scmp.le.s32.totalorder 1, %s22
      %p198 = scmp.lt.s32.totalorder %s22, 3
      %p199 = pnand %p197, %p198
      %p200 = pneg %p199
      // Predicated region
      $region9: #{tpu_custom_call.1} parent=5 // pred_check
        _
      $region10: #{tpu_custom_call.1} parent=5 // pred_check_branch
        %202 = sbr.rel (%p199) target = $region12
      $region11: #{tpu_custom_call.1} parent=5 // pred_region
        %s203 = ssub.s32 %s22, 1
        // Predicated region
        $region13: #{tpu_custom_call.1} parent=11 // pred_check
          %p204 = pneg %p43
        $region14: #{tpu_custom_call.1} parent=11 // pred_check_branch
          %206 = sbr.rel (%p204) target = $region16
        $region15: #{tpu_custom_call.1} parent=11 // pred_region
          %s208 = ssub.s32 16, 16
          %209 = vsyncadd [#allocation5], %s208
          %212 = dma.hbm_to_smem %s0, 16, [#allocation2], [#allocation5]
        $region16: #{tpu_custom_call.1} parent=11 // pred_fallthru
          _
        // Predicated region
        $region17: #{tpu_custom_call.1} parent=11 // pred_check
          %p213 = pneg %p64
        $region18: #{tpu_custom_call.1} parent=11 // pred_check_branch
          %215 = sbr.rel (%p213) target = $region20
        $region19: #{tpu_custom_call.1} parent=11 // pred_region
          %s217 = ssub.s32 2048, 2048
          %218 = vsyncadd [#allocation3], %s217
          %s219 = sshll.u32 [#allocation6], 4
          %s220 = int_to_ptr.vmem [resolvable:$true] %s219
          %225 = dma.hbm_to_vmem [thread:$0]  %s1, 2048, %s220, [#allocation3], 128, 128, 8
        $region20: #{tpu_custom_call.1} parent=11 // pred_fallthru
          _
        // Predicated region
        $region21: #{tpu_custom_call.1} parent=11 // pred_check
          %p226 = pneg %p85
        $region22: #{tpu_custom_call.1} parent=11 // pred_check_branch
          %228 = sbr.rel (%p226) target = $region24
        $region23: #{tpu_custom_call.1} parent=11 // pred_region
          %s230 = ssub.s32 2048, 2048
          %231 = vsyncadd [#allocation8], %s230
          %s232 = sshll.u32 [#allocation7], 4
          %s233 = int_to_ptr.vmem [resolvable:$true] %s232
          %238 = dma.hbm_to_vmem [thread:$0]  %s2, 2048, %s233, [#allocation8], 128, 128, 8
        $region24: #{tpu_custom_call.1} parent=11 // pred_fallthru
          _
      $region12: #{tpu_custom_call.1} parent=5 // pred_fallthru
        _
      %p239 = scmp.lt.s32.totalorder %s22, 2
      // Predicated region
      $region25: #{tpu_custom_call.1} parent=5 // pred_check
        %p240 = pneg %p239
      $region26: #{tpu_custom_call.1} parent=5 // pred_check_branch
        %242 = sbr.rel (%p240) target = $region28
      $region27: #{tpu_custom_call.1} parent=5 // pred_region
        // Predicated region
        $region29: #{tpu_custom_call.1} parent=27 // pred_check
          %p243 = pneg %p105
        $region30: #{tpu_custom_call.1} parent=27 // pred_check_branch
          %245 = sbr.rel (%p243) target = $region32
        $region31: #{tpu_custom_call.1} parent=27 // pred_region
          %s246 = sand.u32 %s22, 1
          %s247 = scalar_lea.sflag [#allocation3], %s246
          %s248 = sand.u32 %s95, 1
          %s249 = smul.addr %s248, 8
          %s250 = scalar_lea.vmem [#allocation9], %s249
          %s252 = ssub.s32 128, 128
          %253 = vsyncadd %s247, %s252
          %s254 = smul.addr %s22, 128
          %s255 = scalar_lea.hbm %s3, %s254
          %s257 = sshll.u32 %s250, 4
          %s258 = int_to_ptr.vmem [resolvable:$true] %s257
          %260 = dma.hbm_to_vmem [thread:$0]  %s255, 128, %s258, %s247
        $region32: #{tpu_custom_call.1} parent=27 // pred_fallthru
          _
        // Predicated region
        $region33: #{tpu_custom_call.1} parent=27 // pred_check
          %p261 = pneg %p131
        $region34: #{tpu_custom_call.1} parent=27 // pred_check_branch
          %263 = sbr.rel (%p261) target = $region36
        $region35: #{tpu_custom_call.1} parent=27 // pred_region
          %s264 = sand.u32 %s22, 1
          %s265 = scalar_lea.sflag [#allocation3], %s264
          %s266 = sand.u32 %s121, 1
          %s267 = smul.addr %s266, 8
          %s268 = scalar_lea.vmem [#allocation10], %s267
          %s270 = ssub.s32 128, 128
          %271 = vsyncadd %s265, %s270
          %s272 = smul.addr %s22, 128
          %s273 = scalar_lea.hbm %s4, %s272
          %s275 = sshll.u32 %s268, 4
          %s276 = int_to_ptr.vmem [resolvable:$true] %s275
          %278 = dma.hbm_to_vmem [thread:$0]  %s273, 128, %s276, %s265
        $region36: #{tpu_custom_call.1} parent=27 // pred_fallthru
          _
      $region28: #{tpu_custom_call.1} parent=5 // pred_fallthru
        _
      %p279 = scmp.le.s32.totalorder 1, %s22
      %p280 = scmp.lt.s32.totalorder %s22, 3
      %p281 = pnand %p279, %p280
      %p282 = pneg %p281
      // Predicated region
      $region37: #{tpu_custom_call.1} parent=5 // pred_check
        _
      $region38: #{tpu_custom_call.1} parent=5 // pred_check_branch
        %284 = sbr.rel (%p281) target = $region40
      $region39: #{tpu_custom_call.1} parent=5 // pred_region
        %s285 = ssub.s32 %s22, 1
        // Predicated region
        $region41: #{tpu_custom_call.1} parent=39 // pred_check
          %p286 = pneg %p43
        $region42: #{tpu_custom_call.1} parent=39 // pred_check_branch
          %288 = sbr.rel (%p286) target = $region44
        $region43: #{tpu_custom_call.1} parent=39 // pred_region
          %289 = dma.done [#allocation5], 16
        $region44: #{tpu_custom_call.1} parent=39 // pred_fallthru
          _
        // Predicated region
        $region45: #{tpu_custom_call.1} parent=39 // pred_check
          %p290 = pneg %p64
        $region46: #{tpu_custom_call.1} parent=39 // pred_check_branch
          %292 = sbr.rel (%p290) target = $region48
        $region47: #{tpu_custom_call.1} parent=39 // pred_region
          %293 = dma.done [#allocation3], 2048
        $region48: #{tpu_custom_call.1} parent=39 // pred_fallthru
          _
        // Predicated region
        $region49: #{tpu_custom_call.1} parent=39 // pred_check
          %p294 = pneg %p85
        $region50: #{tpu_custom_call.1} parent=39 // pred_check_branch
          %296 = sbr.rel (%p294) target = $region52
        $region51: #{tpu_custom_call.1} parent=39 // pred_region
          %297 = dma.done [#allocation8], 2048
        $region52: #{tpu_custom_call.1} parent=39 // pred_fallthru
          _
        %s298 = sand.u32 %s27, 1
        %s299 = scalar_lea.sflag [#allocation3], %s298
        %s300 = sand.u32 %s98, 1
        %s301 = smul.addr %s300, 8
        %s302 = scalar_lea.vmem [#allocation9], %s301
        // Predicated region
        $region53: #{tpu_custom_call.1} parent=39 // pred_check
          %p303 = pneg %p111
        $region54: #{tpu_custom_call.1} parent=39 // pred_check_branch
          %305 = sbr.rel (%p303) target = $region56
        $region55: #{tpu_custom_call.1} parent=39 // pred_region
          %306 = dma.done %s299, 128
        $region56: #{tpu_custom_call.1} parent=39 // pred_fallthru
          _
        %s307 = sand.u32 %s27, 1
        %s308 = scalar_lea.sflag [#allocation3], %s307
        %s309 = sand.u32 %s124, 1
        %s310 = smul.addr %s309, 8
        %s311 = scalar_lea.vmem [#allocation10], %s310
        // Predicated region
        $region57: #{tpu_custom_call.1} parent=39 // pred_check
          %p312 = pneg %p137
        $region58: #{tpu_custom_call.1} parent=39 // pred_check_branch
          %314 = sbr.rel (%p312) target = $region60
        $region59: #{tpu_custom_call.1} parent=39 // pred_region
          %315 = dma.done %s308, 128
        $region60: #{tpu_custom_call.1} parent=39 // pred_fallthru
          _
        %316 = sfence
        %p317 = pneg %p43
        %p318 = pneg %p40
        %p319 = pneg %p64
        %p320 = pneg %p61
        %p321 = pneg %p85
        %p322 = pneg %p82
        %s323 = sand.u32 %s27, 1
        %s324 = scalar_lea.sflag [#allocation3], %s323
        %s325 = sand.u32 %s98, 1
        %s326 = smul.addr %s325, 8
        %s327 = scalar_lea.vmem [#allocation9], %s326
        %p328 = pneg %p111
        %p329 = pneg %p108
        %s330 = sand.u32 %s27, 1
        %s331 = scalar_lea.sflag [#allocation3], %s330
        %s332 = sand.u32 %s124, 1
        %s333 = smul.addr %s332, 8
        %s334 = scalar_lea.vmem [#allocation10], %s333
        %p335 = pneg %p137
        %p336 = pneg %p134
        %p337 = pneg %p163
        %p338 = pneg %p160
        %s339 = sand.u32 %s150, 1
        %s340 = scalar_lea.sflag [#allocation4], %s339
        %s341 = sand.u32 %s150, 1
        %s342 = smul.addr %s341, 8
        %s343 = scalar_lea.vmem [#allocation11], %s342
        %p344 = pneg %p189
        %p345 = pneg %p186
        %s346 = sand.u32 %s176, 1
        %s347 = scalar_lea.sflag [#allocation13], %s346
        %s348 = sand.u32 %s176, 1
        %s349 = smul.addr %s348, 8
        %s350 = scalar_lea.vmem [#allocation12], %s349
        %s351 = sld [smem:[#allocation2]]
        %s352 = sld [smem:[#allocation2 + $0x2]]
        %v353 = vld [vmem:[#allocation6] sm:$0xff]
        %v354 = vld [vmem:[#allocation6 + $0x8] sm:$0xff]
        %v355 = vld [vmem:[#allocation6 + $0x10] sm:$0xff]
        %v356 = vld [vmem:[#allocation6 + $0x18] sm:$0xff]
        %v357 = vld [vmem:[#allocation6 + $0x20] sm:$0xff]
        %v358 = vld [vmem:[#allocation6 + $0x28] sm:$0xff]
        %v359 = vld [vmem:[#allocation6 + $0x30] sm:$0xff]
        %v360 = vld [vmem:[#allocation6 + $0x38] sm:$0xff]
        %v361 = vld [vmem:[#allocation6 + $0x40] sm:$0xff]
        %v362 = vld [vmem:[#allocation6 + $0x48] sm:$0xff]
        %v363 = vld [vmem:[#allocation6 + $0x50] sm:$0xff]
        %v364 = vld [vmem:[#allocation6 + $0x58] sm:$0xff]
        %v365 = vld [vmem:[#allocation6 + $0x60] sm:$0xff]
        %v366 = vld [vmem:[#allocation6 + $0x68] sm:$0xff]
        %v367 = vld [vmem:[#allocation6 + $0x70] sm:$0xff]
        %v368 = vld [vmem:[#allocation6 + $0x78] sm:$0xff]
        %v369 = vld [vmem:[#allocation7] sm:$0xff]
        %v370 = vld [vmem:[#allocation7 + $0x8] sm:$0xff]
        %v371 = vld [vmem:[#allocation7 + $0x10] sm:$0xff]
        %v372 = vld [vmem:[#allocation7 + $0x18] sm:$0xff]
        %v373 = vld [vmem:[#allocation7 + $0x20] sm:$0xff]
        %v374 = vld [vmem:[#allocation7 + $0x28] sm:$0xff]
        %v375 = vld [vmem:[#allocation7 + $0x30] sm:$0xff]
        %v376 = vld [vmem:[#allocation7 + $0x38] sm:$0xff]
        %v377 = vld [vmem:[#allocation7 + $0x40] sm:$0xff]
        %v378 = vld [vmem:[#allocation7 + $0x48] sm:$0xff]
        %v379 = vld [vmem:[#allocation7 + $0x50] sm:$0xff]
        %v380 = vld [vmem:[#allocation7 + $0x58] sm:$0xff]
        %v381 = vld [vmem:[#allocation7 + $0x60] sm:$0xff]
        %v382 = vld [vmem:[#allocation7 + $0x68] sm:$0xff]
        %v383 = vld [vmem:[#allocation7 + $0x70] sm:$0xff]
        %v384 = vld [vmem:[#allocation7 + $0x78] sm:$0xff]
        %v385 = vld [vmem:[%s302] sm:$0xff]
        %v386 = vld [vmem:[%s311] sm:$0xff]
        %s387 = ssub.f32 1.0, %s351
        %s388 = smul.f32 %s387, %s352
        %s389 = sadd.f32 %s351, %s388
        %s390 = ssub.f32 1.0, %s352
        %s391 = smul.f32 %s387, %s390
        %392 = vadd.xlane.f32.xlu0 %v385
        %v393 = vpop.xlane.xlu0 %392
        %vm394 = vcmp.eq.f32.partialorder %v393, 0.0
        %v395 = vsel %vm394, 1.0, %v393
        %v396 = vrcp.pop %v395
        %v397 = vmul.f32 %v385, %v396
        %398 = vmatprep.subr.mxu0 0.0
        %399 = vmatpush1.msra.mxu0 %v369
        %400 = vmatprep.subr.mxu0 0.0
        %401 = vmatpush1.msra.mxu0 %v370
        %402 = vmatprep.subr.mxu0 0.0
        %403 = vmatpush1.msra.mxu0 %v371
        %404 = vmatprep.subr.mxu0 0.0
        %405 = vmatpush1.msra.mxu0 %v372
        %406 = vmatprep.subr.mxu0 0.0
        %407 = vmatpush1.msra.mxu0 %v373
        %408 = vmatprep.subr.mxu0 0.0
        %409 = vmatpush1.msra.mxu0 %v374
        %410 = vmatprep.subr.mxu0 0.0
        %411 = vmatpush1.msra.mxu0 %v375
        %412 = vmatprep.subr.mxu0 0.0
        %413 = vmatpush1.msra.mxu0 %v376
        %414 = vmatprep.subr.mxu0 0.0
        %415 = vmatpush1.msra.mxu0 %v377
        %416 = vmatprep.subr.mxu0 0.0
        %417 = vmatpush1.msra.mxu0 %v378
        %418 = vmatprep.subr.mxu0 0.0
        %419 = vmatpush1.msra.mxu0 %v379
        %420 = vmatprep.subr.mxu0 0.0
        %421 = vmatpush1.msra.mxu0 %v380
        %422 = vmatprep.subr.mxu0 0.0
        %423 = vmatpush1.msra.mxu0 %v381
        %424 = vmatprep.subr.mxu0 0.0
        %425 = vmatpush1.msra.mxu0 %v382
        %426 = vmatprep.subr.mxu0 0.0
        %427 = vmatpush1.msra.mxu0 %v383
        %428 = vmatprep.subr.mxu0 0.0
        %429 = vmatpush1.msra.mxu0 %v384
        %430 = vmatprep.subr.mxu0 0.0
        %431 = vmatpush1.msra.mxu0 0.0
        %432 = vmatprep.subr.mxu0 0.0
        %433 = vmatpush1.msra.mxu0 0.0
        %434 = vmatprep.subr.mxu0 0.0
        %435 = vmatpush1.msra.mxu0 0.0
        %436 = vmatprep.subr.mxu0 0.0
        %437 = vmatpush1.msra.mxu0 0.0
        %438 = vmatprep.subr.mxu0 0.0
        %439 = vmatpush1.msra.mxu0 0.0
        %440 = vmatprep.subr.mxu0 0.0
        %441 = vmatpush1.msra.mxu0 0.0
        %442 = vmatprep.subr.mxu0 0.0
        %443 = vmatpush1.msra.mxu0 0.0
        %444 = vmatprep.subr.mxu0 0.0
        %445 = vmatpush1.msra.mxu0 0.0
        %446 = vmatprep.subr.mxu0 0.0
        %447 = vmatpush1.msra.mxu0 0.0
        %448 = vmatprep.subr.mxu0 0.0
        %449 = vmatpush1.msra.mxu0 0.0
        %450 = vmatprep.subr.mxu0 0.0
        %451 = vmatpush1.msra.mxu0 0.0
        %452 = vmatprep.subr.mxu0 0.0
        %453 = vmatpush1.msra.mxu0 0.0
        %454 = vmatprep.subr.mxu0 0.0
        %455 = vmatpush1.msra.mxu0 0.0
        %456 = vmatprep.subr.mxu0 0.0
        %457 = vmatpush1.msra.mxu0 0.0
        %458 = vmatprep.subr.mxu0 0.0
        %459 = vmatpush1.msra.mxu0 0.0
        %460 = vmatprep.subr.mxu0 0.0
        %461 = vmatpush1.msra.mxu0 0.0
        %462 = vmatprep.mubr.f32.mxu0 0.0
        %463 = vmatmul.mubr.f32.gmra.mrb[0].mxu0 %v386
        %v464 = vpop.f32.mrb[0].mxu0
        %v465 = vadd.f32 0.0, %v464
        %v466 = vpop.f32.mrb[0].mxu0
        %467 = vdwg.mxu0
        %vm468 = vcmp.eq.f32.partialorder %v465, 0.0
        %v469 = vsel %vm468, 1.0, %v465
        %v470 = vrcp.pop %v469
        %v471 = vstv %s391
        %v472 = vmul.f32 %v397, %v471
        %vm473 = vcmp.gt.f32.partialorder %v472, 0.0
        %v474 = vmul.f32 %v472, %v470
        %v475 = vsel %vm473, %v474, 0.0
        %476 = vmatprep.subr.mxu0 0.0
        %477 = vmatpush1.msra.mxu0 %v353
        %478 = vmatprep.subr.mxu0 0.0
        %479 = vmatpush1.msra.mxu0 %v354
        %480 = vmatprep.subr.mxu0 0.0
        %481 = vmatpush1.msra.mxu0 %v355
        %482 = vmatprep.subr.mxu0 0.0
        %483 = vmatpush1.msra.mxu0 %v356
        %484 = vmatprep.subr.mxu0 0.0
        %485 = vmatpush1.msra.mxu0 %v357
        %486 = vmatprep.subr.mxu0 0.0
        %487 = vmatpush1.msra.mxu0 %v358
        %488 = vmatprep.subr.mxu0 0.0
        %489 = vmatpush1.msra.mxu0 %v359
        %490 = vmatprep.subr.mxu0 0.0
        %491 = vmatpush1.msra.mxu0 %v360
        %492 = vmatprep.subr.mxu0 0.0
        %493 = vmatpush1.msra.mxu0 %v361
        %494 = vmatprep.subr.mxu0 0.0
        %495 = vmatpush1.msra.mxu0 %v362
        %496 = vmatprep.subr.mxu0 0.0
        %497 = vmatpush1.msra.mxu0 %v363
        %498 = vmatprep.subr.mxu0 0.0
        %499 = vmatpush1.msra.mxu0 %v364
        %500 = vmatprep.subr.mxu0 0.0
        %501 = vmatpush1.msra.mxu0 %v365
        %502 = vmatprep.subr.mxu0 0.0
        %503 = vmatpush1.msra.mxu0 %v366
        %504 = vmatprep.subr.mxu0 0.0
        %505 = vmatpush1.msra.mxu0 %v367
        %506 = vmatprep.subr.mxu0 0.0
        %507 = vmatpush1.msra.mxu0 %v368
        %508 = vmatprep.subr.mxu0 0.0
        %509 = vmatpush1.msra.mxu0 0.0
        %510 = vmatprep.subr.mxu0 0.0
        %511 = vmatpush1.msra.mxu0 0.0
        %512 = vmatprep.subr.mxu0 0.0
        %513 = vmatpush1.msra.mxu0 0.0
        %514 = vmatprep.subr.mxu0 0.0
        %515 = vmatpush1.msra.mxu0 0.0
        %516 = vmatprep.subr.mxu0 0.0
        %517 = vmatpush1.msra.mxu0 0.0
        %518 = vmatprep.subr.mxu0 0.0
        %519 = vmatpush1.msra.mxu0 0.0
        %520 = vmatprep.subr.mxu0 0.0
        %521 = vmatpush1.msra.mxu0 0.0
        %522 = vmatprep.subr.mxu0 0.0
        %523 = vmatpush1.msra.mxu0 0.0
        %524 = vmatprep.subr.mxu0 0.0
        %525 = vmatpush1.msra.mxu0 0.0
        %526 = vmatprep.subr.mxu0 0.0
        %527 = vmatpush1.msra.mxu0 0.0
        %528 = vmatprep.subr.mxu0 0.0
        %529 = vmatpush1.msra.mxu0 0.0
        %530 = vmatprep.subr.mxu0 0.0
        %531 = vmatpush1.msra.mxu0 0.0
        %532 = vmatprep.subr.mxu0 0.0
        %533 = vmatpush1.msra.mxu0 0.0
        %534 = vmatprep.subr.mxu0 0.0
        %535 = vmatpush1.msra.mxu0 0.0
        %536 = vmatprep.subr.mxu0 0.0
        %537 = vmatpush1.msra.mxu0 0.0
        %538 = vmatprep.subr.mxu0 0.0
        %539 = vmatpush1.msra.mxu0 0.0
        %540 = vmatprep.mubr.f32.mxu0 0.0
        %541 = vmatmul.mubr.f32.gmra.mrb[0].mxu0 %v475
        %v542 = vpop.f32.mrb[0].mxu0
        %v543 = vadd.f32 0.0, %v542
        %v544 = vpop.f32.mrb[0].mxu0
        %545 = vdwg.mxu0
        %v546 = vmul.f32 %v386, %v543
        %v547 = vstv %s389
        %v548 = vmul.f32 %v397, %v547
        %v549 = vadd.f32 %v548, %v546
        %vm550 = vcmp.gt.f32.partialorder %v385, 0.0
        %v551 = vstv %s351
        %v552 = vsel %vm550, %v551, 0.0
        %553 = vst [vmem:[%s343] sm:$0xff] %v549
        %554 = vst [vmem:[%s350] sm:$0xff] %v552
        %s555 = sand.u32 %s150, 1
        %s556 = scalar_lea.sflag [#allocation4], %s555
        %s557 = sand.u32 %s150, 1
        %s558 = smul.addr %s557, 8
        %s559 = scalar_lea.vmem [#allocation11], %s558
        %s560 = sand.u32 %s176, 1
        %s561 = scalar_lea.sflag [#allocation13], %s560
        %s562 = sand.u32 %s176, 1
        %s563 = smul.addr %s562, 8
        %s564 = scalar_lea.vmem [#allocation12], %s563
        // Predicated region
        $region61: #{tpu_custom_call.1} parent=39 // pred_check
          %p565 = pneg %p160
        $region62: #{tpu_custom_call.1} parent=39 // pred_check_branch
          %567 = sbr.rel (%p565) target = $region64
        $region63: #{tpu_custom_call.1} parent=39 // pred_region
          %s569 = ssub.s32 128, 128
          %570 = vsyncadd %s556, %s569
          %s571 = smul.addr %s27, 128
          %s572 = scalar_lea.hbm %s5, %s571
          %s574 = sshll.u32 %s559, 4
          %s575 = int_to_ptr.vmem [resolvable:$true] %s574
          %577 = dma.vmem_to_hbm [thread:$0]  %s575, 128, %s572, %s556
        $region64: #{tpu_custom_call.1} parent=39 // pred_fallthru
          _
        // Predicated region
        $region65: #{tpu_custom_call.1} parent=39 // pred_check
          %p578 = pneg %p186
        $region66: #{tpu_custom_call.1} parent=39 // pred_check_branch
          %580 = sbr.rel (%p578) target = $region68
        $region67: #{tpu_custom_call.1} parent=39 // pred_region
          %s582 = ssub.s32 128, 128
          %583 = vsyncadd %s561, %s582
          %s584 = smul.addr %s27, 128
          %s585 = scalar_lea.hbm %s6, %s584
          %s587 = sshll.u32 %s564, 4
          %s588 = int_to_ptr.vmem [resolvable:$true] %s587
          %590 = dma.vmem_to_hbm [thread:$0]  %s588, 128, %s585, %s561
        $region68: #{tpu_custom_call.1} parent=39 // pred_fallthru
          _
      $region40: #{tpu_custom_call.1} parent=5 // pred_fallthru
        _
      %p591 = scmp.le.s32.totalorder 2, %s22
      // Predicated region
      $region69: #{tpu_custom_call.1} parent=5 // pred_check
        %p592 = pneg %p591
      $region70: #{tpu_custom_call.1} parent=5 // pred_check_branch
        %594 = sbr.rel (%p592) target = $region72
      $region71: #{tpu_custom_call.1} parent=5 // pred_region
        %s595 = ssub.s32 %s22, 2
        // Predicated region
        $region73: #{tpu_custom_call.1} parent=71 // pred_check
          %p596 = pneg %p166
        $region74: #{tpu_custom_call.1} parent=71 // pred_check_branch
          %598 = sbr.rel (%p596) target = $region76
        $region75: #{tpu_custom_call.1} parent=71 // pred_region
          %s599 = sand.u32 %s151, 1
          %s600 = scalar_lea.sflag [#allocation4], %s599
          %s601 = sand.u32 %s151, 1
          %s602 = smul.addr %s601, 8
          %s603 = scalar_lea.vmem [#allocation11], %s602
          %604 = dma.done %s600, 128
        $region76: #{tpu_custom_call.1} parent=71 // pred_fallthru
          _
        // Predicated region
        $region77: #{tpu_custom_call.1} parent=71 // pred_check
          %p605 = pneg %p192
        $region78: #{tpu_custom_call.1} parent=71 // pred_check_branch
          %607 = sbr.rel (%p605) target = $region80
        $region79: #{tpu_custom_call.1} parent=71 // pred_region
          %s608 = sand.u32 %s177, 1
          %s609 = scalar_lea.sflag [#allocation13], %s608
          %s610 = sand.u32 %s177, 1
          %s611 = smul.addr %s610, 8
          %s612 = scalar_lea.vmem [#allocation12], %s611
          %613 = dma.done %s609, 128
        $region80: #{tpu_custom_call.1} parent=71 // pred_fallthru
          _
      $region72: #{tpu_custom_call.1} parent=5 // pred_fallthru
        _
    $region6: #{tpu_custom_call.1} parent=1 // loop_footer
      %s26 = sadd.s32 1, %s22
    $region7: #{tpu_custom_call.1} parent=1 // loop_footer_branch
      %21 = sbr.rel target = $region3
    $region8: #{tpu_custom_call.1} parent=1 // loop_exit
      _
    %614 = vsyncpa [#allocation3], 1
    %s615 = scalar_lea.sflag [#allocation3], 1
    %616 = vsyncpa %s615, 1
    %617 = vsyncpa [#allocation8], 1
    %618 = vsyncpa [#allocation4], 1
    %s619 = scalar_lea.sflag [#allocation4], 1
    %620 = vsyncpa %s619, 1
    %621 = vsyncpa [#allocation13], 1
    %s622 = scalar_lea.sflag [#allocation13], 1
    %623 = vsyncpa %s622, 1
    %624 = vsyncpa [#allocation5], 1
    %s625 = scalar_lea.sflag [#allocation5], 1
    %626 = vsyncpa %s625, 1

</llo_original>
